<compile_context>
chip_gen: v5e
topology: v5e:2x2
jax: 0.10.0
libtpu: 0.0.40
codegen_flags: <defaults>
</compile_context>

<pallas_src>
from functools import partial

import jax
import jax.numpy as jnp
from jax.experimental import pallas as pl
from jax.experimental.pallas import tpu as pltpu


def decoder_kernel(x_ref, w1_ref, b1_ref, w2_ref, b2_ref, o_ref, *, use_bf16=False):
    # x_ref:  (Bb, C, nt)  input tile (channels on sublanes, nodes on lanes)
    # w1_ref: (H, C)       end_conv_1 weight, transposed
    # b1_ref: (H, 1)       end_conv_1 bias
    # w2_ref: (T, H)       end_conv_2 weight, transposed
    # b2_ref: (T, 1)       end_conv_2 bias
    # o_ref:  (Bb, T, nt)  output tile (horizon on sublanes, nodes on lanes)
    w1 = w1_ref[...]
    w2 = w2_ref[...]
    b1 = b1_ref[...]
    b2 = b2_ref[...]
    if use_bf16:
        w1 = w1.astype(jnp.bfloat16)
        w2 = w2.astype(jnp.bfloat16)

    bb = x_ref.shape[0]  # static, kept small (<= 32) by the wrapper
    for b in range(bb):
        x = jnp.maximum(x_ref[b], 0.0)                                # relu(input)
        if use_bf16:
            x = x.astype(jnp.bfloat16)
        h = jnp.dot(w1, x, preferred_element_type=jnp.float32)        # (H, nt)
        h = jnp.maximum(h + b1, 0.0)                                  # relu(end_conv_1)
        if use_bf16:
            h = h.astype(jnp.bfloat16)
        y = jnp.dot(w2, h, preferred_element_type=jnp.float32)        # (T, nt)
        o_ref[b] = (y + b2).astype(o_ref.dtype)                       # end_conv_2


def _round_up(x, m):
    return ((x + m - 1) // m) * m


def _vmem_capacity_bytes():
    try:
        return int(pltpu.get_tpu_info().vmem_capacity_bytes)
    except Exception:
        return 64 * 1024 * 1024  # conservative (v7x-sized) fallback


def mtgnn_decoder(x_nchw, w1, b1, w2, b2, *, use_bf16=False, batch_block_cap=32):
    """
    x_nchw: [B, C, N, 1] float32
    w1: [C, H]  b1: [H]   (end_conv_1: skip_channels -> end_channels)
    w2: [H, T]  b2: [T]   (end_conv_2: end_channels  -> horizon)
    returns: [B, T, N, 1]
    """
    B, C, N, W = x_nchw.shape
    assert W == 1
    H = w1.shape[1]
    T = w2.shape[1]

    # Squeeze trailing width-1 dim: [B, C, N, 1] -> [B, C, N] (no data movement).
    x3d = x_nchw[..., 0]

    LANE = 128
    dtype_bytes = jnp.dtype(x_nchw.dtype).itemsize
    n_pad128 = _round_up(N, LANE)

    # ---- Generation-aware VMEM budgeting ------------------------------------
    vmem_cap = _vmem_capacity_bytes()
    vmem_limit = int(vmem_cap * 0.85)          # raise the scoped limit explicitly
    w_bytes = 2 * dtype_bytes * (
        _round_up(H, 8) * _round_up(C, LANE) + _round_up(H, 8) * LANE
        + _round_up(T, 8) * _round_up(H, LANE) + _round_up(T, 8) * LANE)
    budget = int(vmem_limit * 0.6) - w_bytes   # room for double-buffered in+out blocks

    # Node (lane) tile: a single lane-dense tile when N is moderate; for very
    # large N use a big multiple of 128 and tile over nodes (never below 128).
    if n_pad128 <= 2048:
        nt = n_pad128
    else:
        nt = 1024

    def per_elem_bytes(nt_):
        # One batch element's share of (input block + output block); output
        # sublanes are padded up to 8.
        return (_round_up(C, 8) + _round_up(T, 8)) * nt_ * dtype_bytes

    # Batch block: as many batch elements per step as the (double-buffered)
    # VMEM budget allows, capped to keep the in-kernel unroll small.
    Bb = max(1, min(B, batch_block_cap, budget // max(1, 2 * per_elem_bytes(nt))))

    grid_b = pl.cdiv(B, Bb)
    grid_n = pl.cdiv(N, nt)

    # Keep at least 2 parallel grid steps so both v7x TensorCores get work.
    if grid_b * grid_n < 2:
        if B >= 2:
            Bb = pl.cdiv(B, 2)
            grid_b = pl.cdiv(B, Bb)
        elif n_pad128 >= 2 * LANE:
            nt = _round_up(pl.cdiv(n_pad128, 2), LANE)
            grid_n = pl.cdiv(N, nt)
    grid = (grid_b, grid_n)

    # One-time tiny weight prep: transpose so both matmuls are
    # weight @ activations with nodes on the lane axis.
    w1t = jnp.transpose(w1)            # [H, C]
    w2t = jnp.transpose(w2)            # [T, H]
    b1_2d = b1.reshape(H, 1)
    b2_2d = b2.reshape(T, 1)

    out3d = pl.pallas_call(
        partial(decoder_kernel, use_bf16=use_bf16),
        out_shape=jax.ShapeDtypeStruct((B, T, N), x_nchw.dtype),
        grid_spec=pltpu.PrefetchScalarGridSpec(
            num_scalar_prefetch=0,
            grid=grid,
            in_specs=[
                # (Bb, C, nt) input blocks; ragged B / N handled by Pallas
                # (partial reads are padded, partial stores are masked).
                pl.BlockSpec((Bb, C, nt), lambda b, nb: (b, 0, nb)),
                # weights / biases: constant index_map -> VMEM-resident across grid
                pl.BlockSpec((H, C), lambda b, nb: (0, 0)),
                pl.BlockSpec((H, 1), lambda b, nb: (0, 0)),
                pl.BlockSpec((T, H), lambda b, nb: (0, 0)),
                pl.BlockSpec((T, 1), lambda b, nb: (0, 0)),
            ],
            out_specs=pl.BlockSpec((Bb, T, nt), lambda b, nb: (b, 0, nb)),
        ),
        compiler_params=pltpu.CompilerParams(
            dimension_semantics=("parallel", "parallel"),
            vmem_limit_bytes=vmem_limit,
        ),
    )(x3d, w1t, b1_2d, w2t, b2_2d)

    # Restore the trailing width-1 dim: [B, T, N] -> [B, T, N, 1].
    return out3d[..., None]


if __name__ == "__main__":
    # Small shapes consistent with the module
    B = 2                # batch
    skip_channels = 32   # C (input channels)
    end_channels = 64    # H (hidden of end_conv_1)
    horizon = 8          # T (output channels of end_conv_2)
    N = 16               # number of nodes

    key = jax.random.PRNGKey(0)
    k_x, k_w1, k_b1, k_w2, k_b2 = jax.random.split(key, 5)

    # Deterministic synthetic parameters (Conv2d 1x1 weights flattened to
    # [C_in, C_out]; equivalent to torch weight [C_out, C_in, 1, 1] transposed).
    x = jax.random.normal(k_x, (B, skip_channels, N, 1), dtype=jnp.float32)
    w1 = jax.random.normal(k_w1, (skip_channels, end_channels), dtype=jnp.float32) * 0.1
    b1 = jax.random.normal(k_b1, (end_channels,), dtype=jnp.float32) * 0.1
    w2 = jax.random.normal(k_w2, (end_channels, horizon), dtype=jnp.float32) * 0.1
    b2 = jax.random.normal(k_b2, (horizon,), dtype=jnp.float32) * 0.1

    out = mtgnn_decoder(x, w1, b1, w2, b2)
    out = jax.block_until_ready(out)
    assert out.shape == (B, horizon, N, 1), out.shape

    # Pure-JAX reference check (same semantics as the PyTorch forward)
    xr = jnp.maximum(x[..., 0], 0.0)                              # [B, C, N]
    h = jnp.einsum("bcn,ch->bhn", xr, w1) + b1[None, :, None]
    h = jnp.maximum(h, 0.0)
    yr = jnp.einsum("bhn,ht->btn", h, w2) + b2[None, :, None]
    yr = yr[..., None]
    assert jnp.allclose(out, yr, atol=1e-4, rtol=1e-4)

    print("KERNEL_OK")
</pallas_src>

<mosaic_0001>
module attributes {stable_mosaic.version = 11 : i64} {
  func.func @decoder_kernel(%arg0: i32, %arg1: i32, %arg2: memref<1x32x128xf32, #tpu.memory_space<vmem>>, %arg3: memref<64x32xf32, #tpu.memory_space<vmem>>, %arg4: memref<64x1xf32, #tpu.memory_space<vmem>>, %arg5: memref<8x64xf32, #tpu.memory_space<vmem>>, %arg6: memref<8x1xf32, #tpu.memory_space<vmem>>, %arg7: memref<1x8x128xf32, #tpu.memory_space<vmem>>) attributes {dimension_semantics = [#tpu.dimension_semantics<parallel>, #tpu.dimension_semantics<parallel>], iteration_bounds = array<i64: 2, 1>, scalar_prefetch = 0 : i64, scratch_operands = 0 : i64, tpu.core_type = #tpu.core_type<tc>, window_params = [{transform_indices = @transform_0, window_bounds = array<i64: 1, 32, 128>}, {pipeline_mode = #tpu.pipeline_mode<synchronous>, transform_indices = @transform_1, window_bounds = array<i64: 64, 32>}, {pipeline_mode = #tpu.pipeline_mode<synchronous>, transform_indices = @transform_2, window_bounds = array<i64: 64, 1>}, {pipeline_mode = #tpu.pipeline_mode<synchronous>, transform_indices = @transform_3, window_bounds = array<i64: 8, 64>}, {pipeline_mode = #tpu.pipeline_mode<synchronous>, transform_indices = @transform_4, window_bounds = array<i64: 8, 1>}, {transform_indices = @transform_5, window_bounds = array<i64: 1, 8, 128>}]} {
    %c0 = arith.constant 0 : index
    %c0_0 = arith.constant 0 : index
    %0 = vector.load %arg3[%c0, %c0_0] : memref<64x32xf32, #tpu.memory_space<vmem>>, vector<64x32xf32>
    %c0_1 = arith.constant 0 : index
    %c0_2 = arith.constant 0 : index
    %1 = vector.load %arg5[%c0_1, %c0_2] : memref<8x64xf32, #tpu.memory_space<vmem>>, vector<8x64xf32>
    %c0_3 = arith.constant 0 : index
    %c0_4 = arith.constant 0 : index
    %2 = vector.load %arg4[%c0_3, %c0_4] : memref<64x1xf32, #tpu.memory_space<vmem>>, vector<64x1xf32>
    %c0_5 = arith.constant 0 : index
    %c0_6 = arith.constant 0 : index
    %3 = vector.load %arg6[%c0_5, %c0_6] : memref<8x1xf32, #tpu.memory_space<vmem>>, vector<8x1xf32>
    %c0_7 = arith.constant 0 : index
    %c0_8 = arith.constant 0 : index
    %c0_9 = arith.constant 0 : index
    %4 = vector.load %arg2[%c0_7, %c0_8, %c0_9] : memref<1x32x128xf32, #tpu.memory_space<vmem>>, vector<1x32x128xf32>
    %5 = vector.shape_cast %4 : vector<1x32x128xf32> to vector<32x128xf32>
    %cst = arith.constant 0.000000e+00 : f32
    %6 = vector.broadcast %cst : f32 to vector<32x128xf32>
    %7 = arith.maximumf %5, %6 : vector<32x128xf32>
    %cst_10 = arith.constant dense<0.000000e+00> : vector<64x128xf32>
    %8 = tpu.matmul %0, %7, %cst_10 {dimension_numbers = #tpu.dot_dimension_numbers<[1], [0], [0], [1], [0, 0, 1, 1], [], []>} : vector<64x32xf32>, vector<32x128xf32>, vector<64x128xf32> -> vector<64x128xf32>
    %9 = vector.broadcast %2 : vector<64x1xf32> to vector<64x128xf32>
    %10 = arith.addf %8, %9 : vector<64x128xf32>
    %cst_11 = arith.constant 0.000000e+00 : f32
    %11 = vector.broadcast %cst_11 : f32 to vector<64x128xf32>
    %12 = arith.maximumf %10, %11 : vector<64x128xf32>
    %cst_12 = arith.constant dense<0.000000e+00> : vector<8x128xf32>
    %13 = tpu.matmul %1, %12, %cst_12 {dimension_numbers = #tpu.dot_dimension_numbers<[1], [0], [0], [1], [0, 0, 1, 1], [], []>} : vector<8x64xf32>, vector<64x128xf32>, vector<8x128xf32> -> vector<8x128xf32>
    %14 = vector.broadcast %3 : vector<8x1xf32> to vector<8x128xf32>
    %15 = arith.addf %13, %14 : vector<8x128xf32>
    %c0_13 = arith.constant 0 : index
    %c0_14 = arith.constant 0 : index
    %c0_15 = arith.constant 0 : index
    %16 = vector.load %arg7[%c0_13, %c0_14, %c0_15] : memref<1x8x128xf32, #tpu.memory_space<vmem>>, vector<1x8x128xf32>
    %17 = vector.shape_cast %16 : vector<1x8x128xf32> to vector<8x128xf32>
    %18 = vector.shape_cast %15 : vector<8x128xf32> to vector<1x8x128xf32>
    tpu.vector_store %arg7[%c0_13, %c0_14, %c0_15], %18 {strides = array<i32>} : memref<1x8x128xf32, #tpu.memory_space<vmem>>, vector<1x8x128xf32>,
    return
  }
  func.func @transform_0(%arg0: i32, %arg1: i32) -> (i32, i32, i32) {
    %c0_i32 = arith.constant 0 : i32
    %c0_i32_0 = arith.constant 0 : i32
    return %arg0, %c0_i32, %arg1 : i32, i32, i32
  }
  func.func @transform_1(%arg0: i32, %arg1: i32) -> (i32, i32) {
    %c0_i32 = arith.constant 0 : i32
    %c0_i32_0 = arith.constant 0 : i32
    %c0_i32_1 = arith.constant 0 : i32
    return %c0_i32, %c0_i32_0 : i32, i32
  }
  func.func @transform_2(%arg0: i32, %arg1: i32) -> (i32, i32) {
    %c0_i32 = arith.constant 0 : i32
    %c0_i32_0 = arith.constant 0 : i32
    %c0_i32_1 = arith.constant 0 : i32
    return %c0_i32, %c0_i32_0 : i32, i32
  }
  func.func @transform_3(%arg0: i32, %arg1: i32) -> (i32, i32) {
    %c0_i32 = arith.constant 0 : i32
    %c0_i32_0 = arith.constant 0 : i32
    %c0_i32_1 = arith.constant 0 : i32
    return %c0_i32, %c0_i32_0 : i32, i32
  }
  func.func @transform_4(%arg0: i32, %arg1: i32) -> (i32, i32) {
    %c0_i32 = arith.constant 0 : i32
    %c0_i32_0 = arith.constant 0 : i32
    %c0_i32_1 = arith.constant 0 : i32
    return %c0_i32, %c0_i32_0 : i32, i32
  }
  func.func @transform_5(%arg0: i32, %arg1: i32) -> (i32, i32, i32) {
    %c0_i32 = arith.constant 0 : i32
    %c0_i32_0 = arith.constant 0 : i32
    return %arg0, %c0_i32, %arg1 : i32, i32, i32
  }
}

</mosaic_0001>

<llo_original>
// kernel: tpu_custom_call.1
$region0: #{tpu_custom_call.1}
  #allocation0 [shape = 'u32[]', space=smem, size = 0x4, offset = 0x4, fixed_abs, tag = 'smem constant byte address 0x4 - core index']
  #allocation1 [shape = 'u32[72,128]{1,0:T(1,128)}', space=vmem, size = 0x9000, scoped, tag = 'internal scratch']
  %s0 = inlined_call_operand.vmem [shape: f32[2,32,16], index: 0, kind: input, shape index: {}]
  %s1 = inlined_call_operand.vmem [shape: f32[64,32], index: 1, kind: input, shape index: {}]
  %s2 = inlined_call_operand.vmem [shape: f32[64,1], index: 2, kind: input, shape index: {}]
  %s3 = inlined_call_operand.vmem [shape: f32[8,64], index: 3, kind: input, shape index: {}]
  %s4 = inlined_call_operand.vmem [shape: f32[8,1], index: 4, kind: input, shape index: {}]
  %s5 = inlined_call_operand.hbm [shape: f32[2,8,16], index: 5, kind: output, shape index: {}]
  %s6 = sld [smem:[#allocation0]]
  $region53: #{tpu_custom_call.1} parent=0
    _
  %s8 = ssub.s32 1, %s6
  %s9 = scalar_select 0, %s8, %s6
  $region1: #{tpu_custom_call.1} parent=0
    #allocation2 [shape = 'u8[8192]{0}', space=vmem, size = 0x2000, scoped, tag = 'output window, operand 0']
    #allocation3 [shape = 's32[2]{0}', space=sflag, size = 0x8, scoped, tag = 'scoped memory for tpu_custom_call.1']
    %10 = vsyncpa [#allocation3], 0
    %s11 = scalar_lea.sflag [#allocation3], 1
    %12 = vsyncpa %s11, 0
    loop: start=0, step=1, limit=4
    $region2: #{tpu_custom_call.1} parent=1 // loop_pre_header
      _
    $region3: #{tpu_custom_call.1} parent=1 // loop_header
      %s14 = sphi 0, %s18
      %p15 = scmp.ge.s32.totalorder %s14, 4
      %s21 = sphi 0, %s33
      %s22 = sphi 0, %s29
      %s23 = sphi 0, %s21
      %s24 = sphi 0, %s22
      %s25 = sphi 0, %s23
      %s26 = sphi 0, %s24
      %s38 = sphi 0, %s40
      %s41 = sphi 0, %s38
      %s42 = sphi 0, %s41
      %s58 = sphi 0, %s42
      %s62 = sphi 0, %s62
      %s64 = sphi 0, %s62
      %s65 = sphi 0, %s64
      %s79 = sphi 0, %s65
      %s83 = sphi 0, %s83
      %s85 = sphi 0, %s83
      %s86 = sphi 0, %s85
      %s100 = sphi 0, %s86
      %s104 = sphi 0, %s104
      %s106 = sphi 0, %s104
      %s107 = sphi 0, %s106
      %s121 = sphi 0, %s107
      %s125 = sphi 0, %s125
      %s127 = sphi 0, %s125
      %s128 = sphi 0, %s127
      %s142 = sphi 0, %s128
      %s150 = sphi 0, %s152
      %s153 = sphi 0, %s150
      %s154 = sphi 0, %s153
      %s170 = sphi 0, %s154
    $region4: #{tpu_custom_call.1} parent=1 // loop_header_branch
      %17 = sbr.rel (%p15) target = $region8
    $region5: #{tpu_custom_call.1} parent=1 // loop_body
      %s19 = ssub.s32 %s14, 1
      %s20 = ssub.s32 %s14, 2
      %s27 = sadd.s32 1, %s22
      %p28 = scmp.ge.s32.totalorder %s27, 1
      %s29 = scalar_select %p28, 0, %s27
      %s30 = sadd.s32 1, %s21
      %s31 = scalar_select %p28, %s30, %s21
      %p32 = scmp.ge.s32.totalorder %s31, 2
      %s33 = scalar_select %p32, 0, %s31
      %s34 = ssub.s32 %s21, %s33
      %s35 = ssub.s32 %s22, %s29
      %s36 = sor.u32 %s34, %s35
      %p37 = scmp.eq.s32.totalorder %s36, 0
      %s39 = sadd.s32 %s38, 1
      %s40 = scalar_select %p37, %s38, %s39
      %p43 = pneg %p37
      %p44 = scmp.eq.s32.totalorder %s14, 1
      %p45 = por %p43, %p44
      %p46 = scmp.ne.s32.totalorder %s38, %s41
      %p47 = scmp.eq.s32.totalorder %s14, 0
      %p48 = por %p46, %p47
      %p49 = scmp.ne.s32.totalorder %s38, %s41
      %p50 = scmp.eq.s32.totalorder %s19, 1
      %p51 = por %p49, %p50
      %p52 = scmp.ne.s32.totalorder %s41, %s42
      %p53 = scmp.eq.s32.totalorder %s19, 0
      %p54 = por %p52, %p53
      %p55 = scmp.ne.s32.totalorder %s41, %s42
      %p56 = scmp.eq.s32.totalorder %s20, 1
      %p57 = por %p55, %p56
      %p59 = scmp.ne.s32.totalorder %s42, %s58
      %p60 = scmp.eq.s32.totalorder %s20, 0
      %p61 = por %p59, %p60
      %s63 = sadd.s32 %s62, 1
      %p66 = scmp.eq.s32.totalorder %s14, 1
      %p67 = scmp.ne.s32.totalorder %s62, %s64
      %p68 = scmp.eq.s32.totalorder %s14, 0
      %p69 = por %p67, %p68
      %p70 = scmp.ne.s32.totalorder %s62, %s64
      %p71 = scmp.eq.s32.totalorder %s19, 1
      %p72 = por %p70, %p71
      %p73 = scmp.ne.s32.totalorder %s64, %s65
      %p74 = scmp.eq.s32.totalorder %s19, 0
      %p75 = por %p73, %p74
      %p76 = scmp.ne.s32.totalorder %s64, %s65
      %p77 = scmp.eq.s32.totalorder %s20, 1
      %p78 = por %p76, %p77
      %p80 = scmp.ne.s32.totalorder %s65, %s79
      %p81 = scmp.eq.s32.totalorder %s20, 0
      %p82 = por %p80, %p81
      %s84 = sadd.s32 %s83, 1
      %p87 = scmp.eq.s32.totalorder %s14, 1
      %p88 = scmp.ne.s32.totalorder %s83, %s85
      %p89 = scmp.eq.s32.totalorder %s14, 0
      %p90 = por %p88, %p89
      %p91 = scmp.ne.s32.totalorder %s83, %s85
      %p92 = scmp.eq.s32.totalorder %s19, 1
      %p93 = por %p91, %p92
      %p94 = scmp.ne.s32.totalorder %s85, %s86
      %p95 = scmp.eq.s32.totalorder %s19, 0
      %p96 = por %p94, %p95
      %p97 = scmp.ne.s32.totalorder %s85, %s86
      %p98 = scmp.eq.s32.totalorder %s20, 1
      %p99 = por %p97, %p98
      %p101 = scmp.ne.s32.totalorder %s86, %s100
      %p102 = scmp.eq.s32.totalorder %s20, 0
      %p103 = por %p101, %p102
      %s105 = sadd.s32 %s104, 1
      %p108 = scmp.eq.s32.totalorder %s14, 1
      %p109 = scmp.ne.s32.totalorder %s104, %s106
      %p110 = scmp.eq.s32.totalorder %s14, 0
      %p111 = por %p109, %p110
      %p112 = scmp.ne.s32.totalorder %s104, %s106
      %p113 = scmp.eq.s32.totalorder %s19, 1
      %p114 = por %p112, %p113
      %p115 = scmp.ne.s32.totalorder %s106, %s107
      %p116 = scmp.eq.s32.totalorder %s19, 0
      %p117 = por %p115, %p116
      %p118 = scmp.ne.s32.totalorder %s106, %s107
      %p119 = scmp.eq.s32.totalorder %s20, 1
      %p120 = por %p118, %p119
      %p122 = scmp.ne.s32.totalorder %s107, %s121
      %p123 = scmp.eq.s32.totalorder %s20, 0
      %p124 = por %p122, %p123
      %s126 = sadd.s32 %s125, 1
      %p129 = scmp.eq.s32.totalorder %s14, 1
      %p130 = scmp.ne.s32.totalorder %s125, %s127
      %p131 = scmp.eq.s32.totalorder %s14, 0
      %p132 = por %p130, %p131
      %p133 = scmp.ne.s32.totalorder %s125, %s127
      %p134 = scmp.eq.s32.totalorder %s19, 1
      %p135 = por %p133, %p134
      %p136 = scmp.ne.s32.totalorder %s127, %s128
      %p137 = scmp.eq.s32.totalorder %s19, 0
      %p138 = por %p136, %p137
      %p139 = scmp.ne.s32.totalorder %s127, %s128
      %p140 = scmp.eq.s32.totalorder %s20, 1
      %p141 = por %p139, %p140
      %p143 = scmp.ne.s32.totalorder %s128, %s142
      %p144 = scmp.eq.s32.totalorder %s20, 0
      %p145 = por %p143, %p144
      %s146 = ssub.s32 %s21, %s33
      %s147 = ssub.s32 %s22, %s29
      %s148 = sor.u32 %s146, %s147
      %p149 = scmp.eq.s32.totalorder %s148, 0
      %s151 = sadd.s32 %s150, 1
      %s152 = scalar_select %p149, %s150, %s151
      %p155 = pneg %p149
      %p156 = scmp.eq.s32.totalorder %s14, 1
      %p157 = por %p155, %p156
      %p158 = scmp.ne.s32.totalorder %s150, %s153
      %p159 = scmp.eq.s32.totalorder %s14, 0
      %p160 = por %p158, %p159
      %p161 = scmp.ne.s32.totalorder %s150, %s153
      %p162 = scmp.eq.s32.totalorder %s19, 1
      %p163 = por %p161, %p162
      %p164 = scmp.ne.s32.totalorder %s153, %s154
      %p165 = scmp.eq.s32.totalorder %s19, 0
      %p166 = por %p164, %p165
      %p167 = scmp.ne.s32.totalorder %s153, %s154
      %p168 = scmp.eq.s32.totalorder %s20, 1
      %p169 = por %p167, %p168
      %p171 = scmp.ne.s32.totalorder %s154, %s170
      %p172 = scmp.eq.s32.totalorder %s20, 0
      %p173 = por %p171, %p172
      %p174 = scmp.le.s32.totalorder 1, %s14
      %p175 = scmp.lt.s32.totalorder %s14, 3
      %p176 = pnand %p174, %p175
      %p177 = pneg %p176
      // Predicated region
      $region9: #{tpu_custom_call.1} parent=5 // pred_check
        _
      $region10: #{tpu_custom_call.1} parent=5 // pred_check_branch
        %179 = sbr.rel (%p176) target = $region12
      $region11: #{tpu_custom_call.1} parent=5 // pred_region
        %s180 = ssub.s32 %s14, 1
        // Predicated region
        $region13: #{tpu_custom_call.1} parent=11 // pred_check
          %p181 = pneg %p75
        $region14: #{tpu_custom_call.1} parent=11 // pred_check_branch
          %183 = sbr.rel (%p181) target = $region16
        $region15: #{tpu_custom_call.1} parent=11 // pred_region
          _
        $region16: #{tpu_custom_call.1} parent=11 // pred_fallthru
          _
        // Predicated region
        $region17: #{tpu_custom_call.1} parent=11 // pred_check
          %p184 = pneg %p96
        $region18: #{tpu_custom_call.1} parent=11 // pred_check_branch
          %186 = sbr.rel (%p184) target = $region20
        $region19: #{tpu_custom_call.1} parent=11 // pred_region
          _
        $region20: #{tpu_custom_call.1} parent=11 // pred_fallthru
          _
        // Predicated region
        $region21: #{tpu_custom_call.1} parent=11 // pred_check
          %p187 = pneg %p117
        $region22: #{tpu_custom_call.1} parent=11 // pred_check_branch
          %189 = sbr.rel (%p187) target = $region24
        $region23: #{tpu_custom_call.1} parent=11 // pred_region
          _
        $region24: #{tpu_custom_call.1} parent=11 // pred_fallthru
          _
        // Predicated region
        $region25: #{tpu_custom_call.1} parent=11 // pred_check
          %p190 = pneg %p138
        $region26: #{tpu_custom_call.1} parent=11 // pred_check_branch
          %192 = sbr.rel (%p190) target = $region28
        $region27: #{tpu_custom_call.1} parent=11 // pred_region
          _
        $region28: #{tpu_custom_call.1} parent=11 // pred_fallthru
          _
      $region12: #{tpu_custom_call.1} parent=5 // pred_fallthru
        _
      %p193 = scmp.lt.s32.totalorder %s14, 2
      // Predicated region
      $region29: #{tpu_custom_call.1} parent=5 // pred_check
        %p194 = pneg %p193
      $region30: #{tpu_custom_call.1} parent=5 // pred_check_branch
        %196 = sbr.rel (%p194) target = $region32
      $region31: #{tpu_custom_call.1} parent=5 // pred_region
        // Predicated region
        $region33: #{tpu_custom_call.1} parent=31 // pred_check
          %p197 = pneg %p48
        $region34: #{tpu_custom_call.1} parent=31 // pred_check_branch
          %199 = sbr.rel (%p197) target = $region36
        $region35: #{tpu_custom_call.1} parent=31 // pred_region
          %p200 = scmp.lt.s32.totalorder %s21, 1
          %s201 = scalar_select %p200, %s21, 1
          %p202 = scmp.lt.s32.totalorder %s22, 0
          %s203 = scalar_select %p202, %s22, 0
          %s204 = smul.addr %s201, 4
          %s205 = sadd.s32 %s203, %s204
          %s206 = smul.addr %s205, 8
          %s207 = scalar_lea.vmem %s0, %s206
        $region36: #{tpu_custom_call.1} parent=31 // pred_fallthru
          _
      $region32: #{tpu_custom_call.1} parent=5 // pred_fallthru
        _
      %p208 = scmp.le.s32.totalorder 1, %s14
      %p209 = scmp.lt.s32.totalorder %s14, 3
      %p210 = pnand %p208, %p209
      %p211 = pneg %p210
      // Predicated region
      $region37: #{tpu_custom_call.1} parent=5 // pred_check
        _
      $region38: #{tpu_custom_call.1} parent=5 // pred_check_branch
        %213 = sbr.rel (%p210) target = $region40
      $region39: #{tpu_custom_call.1} parent=5 // pred_region
        %s214 = ssub.s32 %s14, 1
        %p215 = scmp.lt.s32.totalorder %s23, 1
        %s216 = scalar_select %p215, %s23, 1
        %p217 = scmp.lt.s32.totalorder %s24, 0
        %s218 = scalar_select %p217, %s24, 0
        %s219 = smul.addr %s216, 4
        %s220 = sadd.s32 %s218, %s219
        %s221 = smul.addr %s220, 8
        %s222 = scalar_lea.vmem %s0, %s221
        %p223 = pneg %p54
        %p224 = pneg %p51
        %p225 = pneg %p75
        %p226 = pneg %p72
        %p227 = pneg %p96
        %p228 = pneg %p93
        %p229 = pneg %p117
        %p230 = pneg %p114
        %p231 = pneg %p138
        %p232 = pneg %p135
        %p233 = pneg %p166
        %p234 = pneg %p163
        %s235 = sand.u32 %s153, 1
        %s236 = scalar_lea.sflag [#allocation3], %s235
        %s237 = sand.u32 %s153, 1
        %s238 = smul.addr %s237, 8
        %s239 = scalar_lea.vmem [#allocation2], %s238
        %p240 = scmp.lt.s32.totalorder %s23, 1
        %s241 = scalar_select %p240, %s23, 1
        %p242 = scmp.lt.s32.totalorder %s24, 0
        %s243 = scalar_select %p242, %s24, 0
        %s244 = smul.addr %s241, 4
        %s245 = sadd.s32 %s243, %s244
        %s246 = smul.addr %s245, 8
        %s247 = scalar_lea.vmem %s0, %s246
        %v248 = vld [vmem:[%s1] sm:$0xff]
        %v249 = vld [vmem:[%s1 + $0x8] sm:$0xff]
        %v250 = vld [vmem:[%s1 + $0x10] sm:$0xff]
        %v251 = vld [vmem:[%s1 + $0x18] sm:$0xff]
        %v252 = vld [vmem:[%s1 + $0x20] sm:$0xff]
        %v253 = vld [vmem:[%s1 + $0x28] sm:$0xff]
        %v254 = vld [vmem:[%s1 + $0x30] sm:$0xff]
        %v255 = vld [vmem:[%s1 + $0x38] sm:$0xff]
        %v256 = vld [vmem:[%s3] sm:$0xff]
        %v257 = vld [vmem:[%s2] sm:$0xff]
        %v258 = vld [vmem:[%s2 + $0x8] sm:$0xff]
        %v259 = vld [vmem:[%s2 + $0x10] sm:$0xff]
        %v260 = vld [vmem:[%s2 + $0x18] sm:$0xff]
        %v261 = vld [vmem:[%s2 + $0x20] sm:$0xff]
        %v262 = vld [vmem:[%s2 + $0x28] sm:$0xff]
        %v263 = vld [vmem:[%s2 + $0x30] sm:$0xff]
        %v264 = vld [vmem:[%s2 + $0x38] sm:$0xff]
        %v265 = vld [vmem:[%s4] sm:$0xff]
        %v266 = vld [vmem:[%s247] sm:$0xff]
        %v267 = vld [vmem:[%s247 + $0x8] sm:$0xff]
        %v268 = vld [vmem:[%s247 + $0x10] sm:$0xff]
        %v269 = vld [vmem:[%s247 + $0x18] sm:$0xff]
        %v270 = vmax.f32 %v266, 0.0
        %v271 = vmax.f32 %v267, 0.0
        %v272 = vmax.f32 %v268, 0.0
        %v273 = vmax.f32 %v269, 0.0
        %275 = vset.pattern.permute.xlu0 0
        %276 = vperm.xlu0 %275, %v257
        %v277 = vpop.permute.xlu0 %276
        %280 = vset.pattern.permute.xlu0 0
        %281 = vperm.xlu0 %280, %v258
        %v282 = vpop.permute.xlu0 %281
        %285 = vset.pattern.permute.xlu0 0
        %286 = vperm.xlu0 %285, %v259
        %v287 = vpop.permute.xlu0 %286
        %290 = vset.pattern.permute.xlu0 0
        %291 = vperm.xlu0 %290, %v260
        %v292 = vpop.permute.xlu0 %291
        %295 = vset.pattern.permute.xlu0 0
        %296 = vperm.xlu0 %295, %v261
        %v297 = vpop.permute.xlu0 %296
        %300 = vset.pattern.permute.xlu0 0
        %301 = vperm.xlu0 %300, %v262
        %v302 = vpop.permute.xlu0 %301
        %305 = vset.pattern.permute.xlu0 0
        %306 = vperm.xlu0 %305, %v263
        %v307 = vpop.permute.xlu0 %306
        %310 = vset.pattern.permute.xlu0 0
        %311 = vperm.xlu0 %310, %v264
        %v312 = vpop.permute.xlu0 %311
        %vm314 = vcmask 261120
        %v316 = vsel %vm314, %v248, 0
        %v319 = vsel %vm314, %v249, 0
        %v322 = vsel %vm314, %v250, 0
        %v325 = vsel %vm314, %v251, 0
        %v328 = vsel %vm314, %v252, 0
        %v331 = vsel %vm314, %v253, 0
        %v334 = vsel %vm314, %v254, 0
        %v337 = vsel %vm314, %v255, 0
        %339 = vmatpush.msra.mxu0 0.0
        %340 = vmatpush.msra.mxu0 0.0
        %341 = vmatpush.msra.mxu0 0.0
        %342 = vmatpush.msra.mxu0 0.0
        %343 = vmatpush.msra.mxu0 0.0
        %344 = vmatpush.msra.mxu0 0.0
        %345 = vmatpush.msra.mxu0 0.0
        %346 = vmatpush.msra.mxu0 0.0
        %347 = vmatpush.msra.mxu0 0.0
        %348 = vmatpush.msra.mxu0 0.0
        %349 = vmatpush.msra.mxu0 0.0
        %350 = vmatpush.msra.mxu0 0.0
        %351 = vmatpush.msra.mxu0 %v273
        %352 = vmatpush.msra.mxu0 %v272
        %353 = vmatpush.msra.mxu0 %v271
        %354 = vmatpush.msra.mxu0 %v270
        %355 = vmatmul.f32.gmra.mxu0 %v316
        %v356 = vpop.f32.mrf.mxu0
        %v357 = vadd.f32 %v277, %v356
        %358 = vmatmul.f32.gmra.mxu0 %v319
        %v359 = vpop.f32.mrf.mxu0
        %v360 = vadd.f32 %v282, %v359
        %361 = vmatmul.f32.gmra.mxu0 %v322
        %v362 = vpop.f32.mrf.mxu0
        %v363 = vadd.f32 %v287, %v362
        %364 = vmatmul.f32.gmra.mxu0 %v325
        %v365 = vpop.f32.mrf.mxu0
        %v366 = vadd.f32 %v292, %v365
        %367 = vmatmul.f32.gmra.mxu0 %v328
        %v368 = vpop.f32.mrf.mxu0
        %v369 = vadd.f32 %v297, %v368
        %370 = vmatmul.f32.gmra.mxu0 %v331
        %v371 = vpop.f32.mrf.mxu0
        %v372 = vadd.f32 %v302, %v371
        %373 = vmatmul.f32.gmra.mxu0 %v334
        %v374 = vpop.f32.mrf.mxu0
        %v375 = vadd.f32 %v307, %v374
        %376 = vmatmul.f32.gmra.mxu0 %v337
        %v377 = vpop.f32.mrf.mxu0
        %v378 = vadd.f32 %v312, %v377
        %379 = vdwg.mxu0
        %v380 = vmax.f32 %v357, 0.0
        %v381 = vmax.f32 %v360, 0.0
        %v382 = vmax.f32 %v363, 0.0
        %v383 = vmax.f32 %v366, 0.0
        %v384 = vmax.f32 %v369, 0.0
        %v385 = vmax.f32 %v372, 0.0
        %v386 = vmax.f32 %v375, 0.0
        %v387 = vmax.f32 %v378, 0.0
        %389 = vset.pattern.permute.xlu0 0
        %390 = vperm.xlu0 %389, %v265
        %v391 = vpop.permute.xlu0 %390
        %vm393 = vcmask 523264
        %v395 = vsel %vm393, %v256, 0
        %397 = vmatpush.msra.mxu0 0.0
        %398 = vmatpush.msra.mxu0 0.0
        %399 = vmatpush.msra.mxu0 0.0
        %400 = vmatpush.msra.mxu0 0.0
        %401 = vmatpush.msra.mxu0 0.0
        %402 = vmatpush.msra.mxu0 0.0
        %403 = vmatpush.msra.mxu0 0.0
        %404 = vmatpush.msra.mxu0 0.0
        %405 = vmatpush.msra.mxu0 %v387
        %406 = vmatpush.msra.mxu0 %v386
        %407 = vmatpush.msra.mxu0 %v385
        %408 = vmatpush.msra.mxu0 %v384
        %409 = vmatpush.msra.mxu0 %v383
        %410 = vmatpush.msra.mxu0 %v382
        %411 = vmatpush.msra.mxu0 %v381
        %412 = vmatpush.msra.mxu0 %v380
        %413 = vmatmul.f32.gmra.mxu0 %v395
        %v414 = vpop.f32.mrf.mxu0
        %v415 = vadd.f32 %v391, %v414
        %416 = vdwg.mxu0
        %417 = vst [vmem:[%s239] sm:$0xff] %v415
        %s418 = sand.u32 %s153, 1
        %s419 = scalar_lea.sflag [#allocation3], %s418
        %s420 = sand.u32 %s153, 1
        %s421 = smul.addr %s420, 8
        %s422 = scalar_lea.vmem [#allocation2], %s421
        // Predicated region
        $region41: #{tpu_custom_call.1} parent=39 // pred_check
          %p423 = pneg %p163
        $region42: #{tpu_custom_call.1} parent=39 // pred_check_branch
          %425 = sbr.rel (%p423) target = $region44
        $region43: #{tpu_custom_call.1} parent=39 // pred_region
          %427 = vsyncadd %s419, 0
          %s428 = sadd.s32 %s24, %s23
          %s429 = smul.addr %s428, 8
          %s430 = scalar_lea.hbm %s5, %s429
          %s432 = sshll.u32 %s422, 4
          %s433 = int_to_ptr.vmem [resolvable:$true] %s432
          %s434 = sshll.u32 %s430, 4
          %s435 = int_to_ptr.hbm [resolvable:$true] %s434
          %437 = dma.vmem_to_hbm [thread:$0]  %s433, 128, %s435, %s419
        $region44: #{tpu_custom_call.1} parent=39 // pred_fallthru
          _
      $region40: #{tpu_custom_call.1} parent=5 // pred_fallthru
        _
      %p438 = scmp.le.s32.totalorder 2, %s14
      // Predicated region
      $region45: #{tpu_custom_call.1} parent=5 // pred_check
        %p439 = pneg %p438
      $region46: #{tpu_custom_call.1} parent=5 // pred_check_branch
        %441 = sbr.rel (%p439) target = $region48
      $region47: #{tpu_custom_call.1} parent=5 // pred_region
        %s442 = ssub.s32 %s14, 2
        // Predicated region
        $region49: #{tpu_custom_call.1} parent=47 // pred_check
          %p443 = pneg %p169
        $region50: #{tpu_custom_call.1} parent=47 // pred_check_branch
          %445 = sbr.rel (%p443) target = $region52
        $region51: #{tpu_custom_call.1} parent=47 // pred_region
          %s446 = sand.u32 %s154, 1
          %s447 = scalar_lea.sflag [#allocation3], %s446
          %s448 = sand.u32 %s154, 1
          %s449 = smul.addr %s448, 8
          %s450 = scalar_lea.vmem [#allocation2], %s449
          %452 = dma.done %s447, 128
        $region52: #{tpu_custom_call.1} parent=47 // pred_fallthru
          _
      $region48: #{tpu_custom_call.1} parent=5 // pred_fallthru
        _
    $region6: #{tpu_custom_call.1} parent=1 // loop_footer
      %s18 = sadd.s32 1, %s14
    $region7: #{tpu_custom_call.1} parent=1 // loop_footer_branch
      %13 = sbr.rel target = $region3
    $region8: #{tpu_custom_call.1} parent=1 // loop_exit
      _
    %453 = vsyncpa [#allocation3], 1
    %s454 = scalar_lea.sflag [#allocation3], 1
    %455 = vsyncpa %s454, 1

</llo_original>
